<compile_context>
chip_gen: v7x
topology: tpu7x:2x2x1
jax: 0.10.0
libtpu: 0.0.40
codegen_flags: <defaults>
</compile_context>

<pallas_src>
import functools

import jax
import jax.numpy as jnp
from jax.experimental import pallas as pl
from jax.experimental.pallas import tpu as pltpu


def _round_up(n: int, m: int) -> int:
    return ((n + m - 1) // m) * m


def _mlp_kernel(x_ref, w1_ref, b1_ref, w2_ref, b2_ref, o_ref):
    # layer1: x @ W1 + b1, f32 accumulation on the MXU.
    h = jnp.dot(x_ref[...], w1_ref[...], preferred_element_type=jnp.float32)
    h = h + b1_ref[...].astype(jnp.float32)       # (1, H) broadcasts over TB rows
    # ReLU (VPU).
    h = jnp.maximum(h, 0.0)
    # layer2: h @ W2 + b2.  Cast back to the weight dtype on purpose so bf16
    # weights hit the bf16 MXU path; no-op when everything is f32.
    y = jnp.dot(h.astype(w2_ref.dtype), w2_ref[...],
                preferred_element_type=jnp.float32)
    y = y + b2_ref[...].astype(jnp.float32)
    o_ref[...] = y.astype(o_ref.dtype)


@functools.partial(jax.jit, static_argnames=("block_batch",))
def mlp_forward(x, w1, b1, w2, b2, *, block_batch: int = 256):
    """x: (B, D_in); w1: (D_in, H); b1: (1, H) or (H,); w2: (H, D_out); b2: (1, D_out) or (D_out,)."""
    B, D_in = x.shape
    H = w1.shape[1]
    D_out = w2.shape[1]

    # --- pad lane dims to 128 multiples, pick the batch tile -----------------
    D_in_p = _round_up(D_in, 128)
    H_p = _round_up(H, 128)
    D_out_p = _round_up(D_out, 128)

    if B >= block_batch:
        TB = block_batch                    # 256-row batch tiles (8-aligned)
    else:
        TB = _round_up(B, 8)                # small batch: one sublane-aligned tile
    B_p = _round_up(B, TB)

    # Zero padding keeps the forward pass exact: padded x columns hit zero W1
    # rows, padded hidden columns get zero weight + zero bias (ReLU(0)=0), and
    # padded output columns are zero and are sliced off below.
    xp = jnp.zeros((B_p, D_in_p), x.dtype).at[:B, :D_in].set(x)
    w1p = jnp.zeros((D_in_p, H_p), w1.dtype).at[:D_in, :H].set(w1)
    b1p = jnp.zeros((1, H_p), b1.dtype).at[:, :H].set(jnp.reshape(b1, (1, H)))
    w2p = jnp.zeros((H_p, D_out_p), w2.dtype).at[:H, :D_out].set(w2)
    b2p = jnp.zeros((1, D_out_p), b2.dtype).at[:, :D_out].set(jnp.reshape(b2, (1, D_out)))

    grid = (B_p // TB,)

    itemsize = jnp.dtype(x.dtype).itemsize
    flops = 2 * B_p * (D_in_p * H_p + H_p * D_out_p)
    bytes_accessed = (
        xp.size * itemsize
        + w1p.size * jnp.dtype(w1.dtype).itemsize
        + b1p.size * jnp.dtype(b1.dtype).itemsize
        + w2p.size * jnp.dtype(w2.dtype).itemsize
        + b2p.size * jnp.dtype(b2.dtype).itemsize
        + B_p * D_out_p * itemsize
    )

    out_padded = pl.pallas_call(
        _mlp_kernel,
        out_shape=jax.ShapeDtypeStruct((B_p, D_out_p), x.dtype),
        grid=grid,
        in_specs=[
            # streamed per batch tile
            pl.BlockSpec((TB, D_in_p), lambda i: (i, 0)),
            # weights / biases: same block every step -> stay VMEM-resident
            pl.BlockSpec((D_in_p, H_p), lambda i: (0, 0)),
            pl.BlockSpec((1, H_p), lambda i: (0, 0)),
            pl.BlockSpec((H_p, D_out_p), lambda i: (0, 0)),
            pl.BlockSpec((1, D_out_p), lambda i: (0, 0)),
        ],
        out_specs=pl.BlockSpec((TB, D_out_p), lambda i: (i, 0)),
        compiler_params=pltpu.CompilerParams(
            # batch tiles are independent -> shard across TensorCores on v7x
            dimension_semantics=("parallel",),
            # sized against v7x's 64 MiB VMEM; well above what this tile plan needs
            vmem_limit_bytes=48 * 1024 * 1024,
        ),
        cost_estimate=pl.CostEstimate(
            flops=flops, transcendentals=0, bytes_accessed=bytes_accessed
        ),
    )(xp, w1p, b1p, w2p, b2p)

    return out_padded[:B, :D_out]


def init_mlp_params(key, input_dim, hidden_dim, output_dim, dtype=jnp.float32):
    """Deterministic init mimicking nn.Linear's U(-1/sqrt(fan_in), 1/sqrt(fan_in))."""
    k1, k2, k3, k4 = jax.random.split(key, 4)
    bound1 = 1.0 / (input_dim ** 0.5)
    bound2 = 1.0 / (hidden_dim ** 0.5)
    # Stored as (in, out): transpose of PyTorch's (out, in) weight layout.
    w1 = jax.random.uniform(k1, (input_dim, hidden_dim), dtype, -bound1, bound1)
    b1 = jax.random.uniform(k2, (1, hidden_dim), dtype, -bound1, bound1)
    w2 = jax.random.uniform(k3, (hidden_dim, output_dim), dtype, -bound2, bound2)
    b2 = jax.random.uniform(k4, (1, output_dim), dtype, -bound2, bound2)
    return w1, b1, w2, b2


if __name__ == "__main__":
    batch = 8
    input_dim = 32
    hidden_dim = 64
    output_dim = 16

    key = jax.random.PRNGKey(0)
    kx, kp = jax.random.split(key)
    x = jax.random.normal(kx, (batch, input_dim), dtype=jnp.float32)
    w1, b1, w2, b2 = init_mlp_params(kp, input_dim, hidden_dim, output_dim)

    out = mlp_forward(x, w1, b1, w2, b2)
    out = jax.block_until_ready(out)

    # Pure-JAX reference check of the same forward semantics.
    ref = jnp.maximum(x @ w1 + b1, 0.0) @ w2 + b2
    assert out.shape == (batch, output_dim)
    assert jnp.allclose(out, ref, atol=1e-5, rtol=1e-5)

    print("KERNEL_OK")
</pallas_src>

<mosaic_0001>
module attributes {stable_mosaic.version = 11 : i64} {
  func.func @_mlp_kernel(%arg0: i32, %arg1: memref<8x128xf32, #tpu.memory_space<vmem>>, %arg2: memref<128x128xf32, #tpu.memory_space<vmem>>, %arg3: memref<1x128xf32, #tpu.memory_space<vmem>>, %arg4: memref<128x128xf32, #tpu.memory_space<vmem>>, %arg5: memref<1x128xf32, #tpu.memory_space<vmem>>, %arg6: memref<8x128xf32, #tpu.memory_space<vmem>>) attributes {dimension_semantics = [#tpu.dimension_semantics<parallel>], iteration_bounds = array<i64: 1>, scalar_prefetch = 0 : i64, scratch_operands = 0 : i64, tpu.core_type = #tpu.core_type<tc>, window_params = [{transform_indices = @transform_0, window_bounds = array<i64: 8, 128>}, {pipeline_mode = #tpu.pipeline_mode<synchronous>, transform_indices = @transform_1, window_bounds = array<i64: 128, 128>}, {pipeline_mode = #tpu.pipeline_mode<synchronous>, transform_indices = @transform_2, window_bounds = array<i64: 1, 128>}, {pipeline_mode = #tpu.pipeline_mode<synchronous>, transform_indices = @transform_3, window_bounds = array<i64: 128, 128>}, {pipeline_mode = #tpu.pipeline_mode<synchronous>, transform_indices = @transform_4, window_bounds = array<i64: 1, 128>}, {transform_indices = @transform_5, window_bounds = array<i64: 8, 128>}]} {
    %c0 = arith.constant 0 : index
    %c0_0 = arith.constant 0 : index
    %0 = vector.load %arg1[%c0, %c0_0] : memref<8x128xf32, #tpu.memory_space<vmem>>, vector<8x128xf32>
    %c0_1 = arith.constant 0 : index
    %c0_2 = arith.constant 0 : index
    %1 = vector.load %arg2[%c0_1, %c0_2] : memref<128x128xf32, #tpu.memory_space<vmem>>, vector<128x128xf32>
    %cst = arith.constant dense<0.000000e+00> : vector<8x128xf32>
    %2 = tpu.matmul %0, %1, %cst {dimension_numbers = #tpu.dot_dimension_numbers<[1], [0], [0], [1], [0, 0, 1, 1], [], []>} : vector<8x128xf32>, vector<128x128xf32>, vector<8x128xf32> -> vector<8x128xf32>
    %c0_3 = arith.constant 0 : index
    %c0_4 = arith.constant 0 : index
    %3 = vector.load %arg3[%c0_3, %c0_4] : memref<1x128xf32, #tpu.memory_space<vmem>>, vector<1x128xf32>
    %4 = vector.broadcast %3 : vector<1x128xf32> to vector<8x128xf32>
    %5 = arith.addf %2, %4 : vector<8x128xf32>
    %cst_5 = arith.constant 0.000000e+00 : f32
    %6 = vector.broadcast %cst_5 : f32 to vector<8x128xf32>
    %7 = arith.maximumf %5, %6 : vector<8x128xf32>
    %c0_6 = arith.constant 0 : index
    %c0_7 = arith.constant 0 : index
    %8 = vector.load %arg4[%c0_6, %c0_7] : memref<128x128xf32, #tpu.memory_space<vmem>>, vector<128x128xf32>
    %cst_8 = arith.constant dense<0.000000e+00> : vector<8x128xf32>
    %9 = tpu.matmul %7, %8, %cst_8 {dimension_numbers = #tpu.dot_dimension_numbers<[1], [0], [0], [1], [0, 0, 1, 1], [], []>} : vector<8x128xf32>, vector<128x128xf32>, vector<8x128xf32> -> vector<8x128xf32>
    %c0_9 = arith.constant 0 : index
    %c0_10 = arith.constant 0 : index
    %10 = vector.load %arg5[%c0_9, %c0_10] : memref<1x128xf32, #tpu.memory_space<vmem>>, vector<1x128xf32>
    %11 = vector.broadcast %10 : vector<1x128xf32> to vector<8x128xf32>
    %12 = arith.addf %9, %11 : vector<8x128xf32>
    %c0_11 = arith.constant 0 : index
    %c0_12 = arith.constant 0 : index
    %13 = vector.load %arg6[%c0_11, %c0_12] : memref<8x128xf32, #tpu.memory_space<vmem>>, vector<8x128xf32>
    tpu.vector_store %arg6[%c0_11, %c0_12], %12 {strides = array<i32>} : memref<8x128xf32, #tpu.memory_space<vmem>>, vector<8x128xf32>,
    return
  }
  func.func @transform_0(%arg0: i32) -> (i32, i32) {
    %c0_i32 = arith.constant 0 : i32
    %c0_i32_0 = arith.constant 0 : i32
    return %arg0, %c0_i32 : i32, i32
  }
  func.func @transform_1(%arg0: i32) -> (i32, i32) {
    %c0_i32 = arith.constant 0 : i32
    %c0_i32_0 = arith.constant 0 : i32
    %c0_i32_1 = arith.constant 0 : i32
    return %c0_i32, %c0_i32_0 : i32, i32
  }
  func.func @transform_2(%arg0: i32) -> (i32, i32) {
    %c0_i32 = arith.constant 0 : i32
    %c0_i32_0 = arith.constant 0 : i32
    %c0_i32_1 = arith.constant 0 : i32
    return %c0_i32, %c0_i32_0 : i32, i32
  }
  func.func @transform_3(%arg0: i32) -> (i32, i32) {
    %c0_i32 = arith.constant 0 : i32
    %c0_i32_0 = arith.constant 0 : i32
    %c0_i32_1 = arith.constant 0 : i32
    return %c0_i32, %c0_i32_0 : i32, i32
  }
  func.func @transform_4(%arg0: i32) -> (i32, i32) {
    %c0_i32 = arith.constant 0 : i32
    %c0_i32_0 = arith.constant 0 : i32
    %c0_i32_1 = arith.constant 0 : i32
    return %c0_i32, %c0_i32_0 : i32, i32
  }
  func.func @transform_5(%arg0: i32) -> (i32, i32) {
    %c0_i32 = arith.constant 0 : i32
    %c0_i32_0 = arith.constant 0 : i32
    return %arg0, %c0_i32 : i32, i32
  }
}

</mosaic_0001>

<llo_original>
// kernel: mlp_forward.1
$region0: #{mlp_forward.1}
  #allocation0 [shape = 'u32[]', space=smem, size = 0x4, offset = 0x4, fixed_abs, tag = 'smem constant byte address 0x4 - core index']
  #allocation1 [shape = 'u32[144,128]{1,0:T(1,128)}', space=vmem, size = 0x12000, scoped, tag = 'internal scratch']
  %s0 = inlined_call_operand.vmem [shape: f32[8,128], index: 0, kind: input, shape index: {}]
  %s1 = inlined_call_operand.vmem [shape: f32[128,128], index: 1, kind: input, shape index: {}]
  %s2 = inlined_call_operand.vmem [shape: f32[1,128], index: 2, kind: input, shape index: {}]
  %s3 = inlined_call_operand.vmem [shape: f32[128,128], index: 3, kind: input, shape index: {}]
  %s4 = inlined_call_operand.vmem [shape: f32[1,128], index: 4, kind: input, shape index: {}]
  %s5 = inlined_call_operand.hbm [shape: f32[8,128], index: 5, kind: output, shape index: {}]
  %s6 = sld [smem:[#allocation0]]
  $region30: #{mlp_forward.1} parent=0
    _
  %s8 = ssub.s32 1, %s6
  %s9 = scalar_select 0, %s8, %s6
  $region1: #{mlp_forward.1} parent=0
    #allocation2 [shape = 'u8[4096]{0}', space=vmem, size = 0x1000, scoped, tag = 'output window, operand 0, single buffered']
    #allocation3 [shape = 's32[1]{0}', space=sflag, size = 0x4, scoped, tag = 'scoped memory for mlp_forward.1']
    %10 = vsyncpa [#allocation3], 0
    // Predicated region
    $region2: #{mlp_forward.1} parent=1 // pred_check
      _
    $region3: #{mlp_forward.1} parent=1 // pred_check_branch
      %12 = sbr.rel (0) target = $region5
    $region4: #{mlp_forward.1} parent=1 // pred_region
      _
    $region5: #{mlp_forward.1} parent=1 // pred_fallthru
      _
    // Predicated region
    $region6: #{mlp_forward.1} parent=1 // pred_check
      _
    $region7: #{mlp_forward.1} parent=1 // pred_check_branch
      %14 = sbr.rel (0) target = $region9
    $region8: #{mlp_forward.1} parent=1 // pred_region
      _
    $region9: #{mlp_forward.1} parent=1 // pred_fallthru
      _
    // Predicated region
    $region10: #{mlp_forward.1} parent=1 // pred_check
      _
    $region11: #{mlp_forward.1} parent=1 // pred_check_branch
      %16 = sbr.rel (0) target = $region13
    $region12: #{mlp_forward.1} parent=1 // pred_region
      _
    $region13: #{mlp_forward.1} parent=1 // pred_fallthru
      _
    // Predicated region
    $region14: #{mlp_forward.1} parent=1 // pred_check
      _
    $region15: #{mlp_forward.1} parent=1 // pred_check_branch
      %18 = sbr.rel (0) target = $region17
    $region16: #{mlp_forward.1} parent=1 // pred_region
      _
    $region17: #{mlp_forward.1} parent=1 // pred_fallthru
      _
    // Predicated region
    $region18: #{mlp_forward.1} parent=1 // pred_check
      _
    $region19: #{mlp_forward.1} parent=1 // pred_check_branch
      %20 = sbr.rel (0) target = $region21
    $region20: #{mlp_forward.1} parent=1 // pred_region
      _
    $region21: #{mlp_forward.1} parent=1 // pred_fallthru
      _
    %v21 = vld [vmem:[%s0] sm:$0xff]
    %v22 = vld [vmem:[%s1] sm:$0xff]
    %v23 = vld [vmem:[%s1 + $0x8] sm:$0xff]
    %v24 = vld [vmem:[%s1 + $0x10] sm:$0xff]
    %v25 = vld [vmem:[%s1 + $0x18] sm:$0xff]
    %v26 = vld [vmem:[%s1 + $0x20] sm:$0xff]
    %v27 = vld [vmem:[%s1 + $0x28] sm:$0xff]
    %v28 = vld [vmem:[%s1 + $0x30] sm:$0xff]
    %v29 = vld [vmem:[%s1 + $0x38] sm:$0xff]
    %v30 = vld [vmem:[%s1 + $0x40] sm:$0xff]
    %v31 = vld [vmem:[%s1 + $0x48] sm:$0xff]
    %v32 = vld [vmem:[%s1 + $0x50] sm:$0xff]
    %v33 = vld [vmem:[%s1 + $0x58] sm:$0xff]
    %v34 = vld [vmem:[%s1 + $0x60] sm:$0xff]
    %v35 = vld [vmem:[%s1 + $0x68] sm:$0xff]
    %v36 = vld [vmem:[%s1 + $0x70] sm:$0xff]
    %v37 = vld [vmem:[%s1 + $0x78] sm:$0xff]
    %v38 = vld [vmem:[%s2] sm:$0x1]
    %v40 = vlaneseq
    %v41 = vshrl.u32 %v40, 7
    %v42 = vsub.s32 0, %v41
    %v43 = vrot.slane %v38, %v42
    %45 = vmatprep.subr.mxu0 0.0
    %46 = vmatpush1.msra.mxu0 %v22
    %47 = vmatprep.subr.mxu0 0.0
    %48 = vmatpush1.msra.mxu0 %v23
    %49 = vmatprep.subr.mxu0 0.0
    %50 = vmatpush1.msra.mxu0 %v24
    %51 = vmatprep.subr.mxu0 0.0
    %52 = vmatpush1.msra.mxu0 %v25
    %53 = vmatprep.subr.mxu0 0.0
    %54 = vmatpush1.msra.mxu0 %v26
    %55 = vmatprep.subr.mxu0 0.0
    %56 = vmatpush1.msra.mxu0 %v27
    %57 = vmatprep.subr.mxu0 0.0
    %58 = vmatpush1.msra.mxu0 %v28
    %59 = vmatprep.subr.mxu0 0.0
    %60 = vmatpush1.msra.mxu0 %v29
    %61 = vmatprep.subr.mxu0 0.0
    %62 = vmatpush1.msra.mxu0 %v30
    %63 = vmatprep.subr.mxu0 0.0
    %64 = vmatpush1.msra.mxu0 %v31
    %65 = vmatprep.subr.mxu0 0.0
    %66 = vmatpush1.msra.mxu0 %v32
    %67 = vmatprep.subr.mxu0 0.0
    %68 = vmatpush1.msra.mxu0 %v33
    %69 = vmatprep.subr.mxu0 0.0
    %70 = vmatpush1.msra.mxu0 %v34
    %71 = vmatprep.subr.mxu0 0.0
    %72 = vmatpush1.msra.mxu0 %v35
    %73 = vmatprep.subr.mxu0 0.0
    %74 = vmatpush1.msra.mxu0 %v36
    %75 = vmatprep.subr.mxu0 0.0
    %76 = vmatpush1.msra.mxu0 %v37
    %77 = vmatprep.subr.mxu0 0.0
    %78 = vmatpush1.msra.mxu0 0.0
    %79 = vmatprep.subr.mxu0 0.0
    %80 = vmatpush1.msra.mxu0 0.0
    %81 = vmatprep.subr.mxu0 0.0
    %82 = vmatpush1.msra.mxu0 0.0
    %83 = vmatprep.subr.mxu0 0.0
    %84 = vmatpush1.msra.mxu0 0.0
    %85 = vmatprep.subr.mxu0 0.0
    %86 = vmatpush1.msra.mxu0 0.0
    %87 = vmatprep.subr.mxu0 0.0
    %88 = vmatpush1.msra.mxu0 0.0
    %89 = vmatprep.subr.mxu0 0.0
    %90 = vmatpush1.msra.mxu0 0.0
    %91 = vmatprep.subr.mxu0 0.0
    %92 = vmatpush1.msra.mxu0 0.0
    %93 = vmatprep.subr.mxu0 0.0
    %94 = vmatpush1.msra.mxu0 0.0
    %95 = vmatprep.subr.mxu0 0.0
    %96 = vmatpush1.msra.mxu0 0.0
    %97 = vmatprep.subr.mxu0 0.0
    %98 = vmatpush1.msra.mxu0 0.0
    %99 = vmatprep.subr.mxu0 0.0
    %100 = vmatpush1.msra.mxu0 0.0
    %101 = vmatprep.subr.mxu0 0.0
    %102 = vmatpush1.msra.mxu0 0.0
    %103 = vmatprep.subr.mxu0 0.0
    %104 = vmatpush1.msra.mxu0 0.0
    %105 = vmatprep.subr.mxu0 0.0
    %106 = vmatpush1.msra.mxu0 0.0
    %107 = vmatprep.subr.mxu0 0.0
    %108 = vmatpush1.msra.mxu0 0.0
    %109 = vmatprep.mubr.f32.mxu0 0.0
    %110 = vmatmul.mubr.f32.gmra.mrb[0].mxu0 %v21
    %v111 = vpop.f32.mrb[0].mxu0
    %v112 = vadd.f32 %v43, %v111
    %v113 = vpop.f32.mrb[0].mxu0
    %114 = vdwg.mxu0
    %v115 = vmax.f32 %v112, 0.0
    %v116 = vld [vmem:[%s3] sm:$0xff]
    %v117 = vld [vmem:[%s3 + $0x8] sm:$0xff]
    %v118 = vld [vmem:[%s3 + $0x10] sm:$0xff]
    %v119 = vld [vmem:[%s3 + $0x18] sm:$0xff]
    %v120 = vld [vmem:[%s3 + $0x20] sm:$0xff]
    %v121 = vld [vmem:[%s3 + $0x28] sm:$0xff]
    %v122 = vld [vmem:[%s3 + $0x30] sm:$0xff]
    %v123 = vld [vmem:[%s3 + $0x38] sm:$0xff]
    %v124 = vld [vmem:[%s3 + $0x40] sm:$0xff]
    %v125 = vld [vmem:[%s3 + $0x48] sm:$0xff]
    %v126 = vld [vmem:[%s3 + $0x50] sm:$0xff]
    %v127 = vld [vmem:[%s3 + $0x58] sm:$0xff]
    %v128 = vld [vmem:[%s3 + $0x60] sm:$0xff]
    %v129 = vld [vmem:[%s3 + $0x68] sm:$0xff]
    %v130 = vld [vmem:[%s3 + $0x70] sm:$0xff]
    %v131 = vld [vmem:[%s3 + $0x78] sm:$0xff]
    %v132 = vld [vmem:[%s4] sm:$0x1]
    %v134 = vlaneseq
    %v135 = vshrl.u32 %v134, 7
    %v136 = vsub.s32 0, %v135
    %v137 = vrot.slane %v132, %v136
    %139 = vmatprep.subr.mxu0 0.0
    %140 = vmatpush1.msra.mxu0 %v116
    %141 = vmatprep.subr.mxu0 0.0
    %142 = vmatpush1.msra.mxu0 %v117
    %143 = vmatprep.subr.mxu0 0.0
    %144 = vmatpush1.msra.mxu0 %v118
    %145 = vmatprep.subr.mxu0 0.0
    %146 = vmatpush1.msra.mxu0 %v119
    %147 = vmatprep.subr.mxu0 0.0
    %148 = vmatpush1.msra.mxu0 %v120
    %149 = vmatprep.subr.mxu0 0.0
    %150 = vmatpush1.msra.mxu0 %v121
    %151 = vmatprep.subr.mxu0 0.0
    %152 = vmatpush1.msra.mxu0 %v122
    %153 = vmatprep.subr.mxu0 0.0
    %154 = vmatpush1.msra.mxu0 %v123
    %155 = vmatprep.subr.mxu0 0.0
    %156 = vmatpush1.msra.mxu0 %v124
    %157 = vmatprep.subr.mxu0 0.0
    %158 = vmatpush1.msra.mxu0 %v125
    %159 = vmatprep.subr.mxu0 0.0
    %160 = vmatpush1.msra.mxu0 %v126
    %161 = vmatprep.subr.mxu0 0.0
    %162 = vmatpush1.msra.mxu0 %v127
    %163 = vmatprep.subr.mxu0 0.0
    %164 = vmatpush1.msra.mxu0 %v128
    %165 = vmatprep.subr.mxu0 0.0
    %166 = vmatpush1.msra.mxu0 %v129
    %167 = vmatprep.subr.mxu0 0.0
    %168 = vmatpush1.msra.mxu0 %v130
    %169 = vmatprep.subr.mxu0 0.0
    %170 = vmatpush1.msra.mxu0 %v131
    %171 = vmatprep.subr.mxu0 0.0
    %172 = vmatpush1.msra.mxu0 0.0
    %173 = vmatprep.subr.mxu0 0.0
    %174 = vmatpush1.msra.mxu0 0.0
    %175 = vmatprep.subr.mxu0 0.0
    %176 = vmatpush1.msra.mxu0 0.0
    %177 = vmatprep.subr.mxu0 0.0
    %178 = vmatpush1.msra.mxu0 0.0
    %179 = vmatprep.subr.mxu0 0.0
    %180 = vmatpush1.msra.mxu0 0.0
    %181 = vmatprep.subr.mxu0 0.0
    %182 = vmatpush1.msra.mxu0 0.0
    %183 = vmatprep.subr.mxu0 0.0
    %184 = vmatpush1.msra.mxu0 0.0
    %185 = vmatprep.subr.mxu0 0.0
    %186 = vmatpush1.msra.mxu0 0.0
    %187 = vmatprep.subr.mxu0 0.0
    %188 = vmatpush1.msra.mxu0 0.0
    %189 = vmatprep.subr.mxu0 0.0
    %190 = vmatpush1.msra.mxu0 0.0
    %191 = vmatprep.subr.mxu0 0.0
    %192 = vmatpush1.msra.mxu0 0.0
    %193 = vmatprep.subr.mxu0 0.0
    %194 = vmatpush1.msra.mxu0 0.0
    %195 = vmatprep.subr.mxu0 0.0
    %196 = vmatpush1.msra.mxu0 0.0
    %197 = vmatprep.subr.mxu0 0.0
    %198 = vmatpush1.msra.mxu0 0.0
    %199 = vmatprep.subr.mxu0 0.0
    %200 = vmatpush1.msra.mxu0 0.0
    %201 = vmatprep.subr.mxu0 0.0
    %202 = vmatpush1.msra.mxu0 0.0
    %203 = vmatprep.mubr.f32.mxu0 0.0
    %204 = vmatmul.mubr.f32.gmra.mrb[0].mxu0 %v115
    %v205 = vpop.f32.mrb[0].mxu0
    %v206 = vadd.f32 %v137, %v205
    %v207 = vpop.f32.mrb[0].mxu0
    %208 = vdwg.mxu0
    %209 = vst [vmem:[#allocation2] sm:$0xff] %v206
    // Predicated region
    $region22: #{mlp_forward.1} parent=1 // pred_check
      _
    $region23: #{mlp_forward.1} parent=1 // pred_check_branch
      %211 = sbr.rel (0) target = $region25
    $region24: #{mlp_forward.1} parent=1 // pred_region
      %s213 = ssub.s32 128, 128
      %214 = vsyncadd [#allocation3], %s213
      %s216 = sshll.u32 [#allocation2], 4
      %s217 = int_to_ptr.vmem [resolvable:$true] %s216
      %219 = dma.vmem_to_hbm [thread:$0]  %s217, 128, %s5, [#allocation3]
    $region25: #{mlp_forward.1} parent=1 // pred_fallthru
      _
    // Predicated region
    $region26: #{mlp_forward.1} parent=1 // pred_check
      _
    $region27: #{mlp_forward.1} parent=1 // pred_check_branch
      %221 = sbr.rel (0) target = $region29
    $region28: #{mlp_forward.1} parent=1 // pred_region
      %222 = dma.done [#allocation3], 128
    $region29: #{mlp_forward.1} parent=1 // pred_fallthru
      _
    %223 = vsyncpa [#allocation3], 1

</llo_original>
